<compile_context>
chip_gen: v7x
topology: tpu7x:2x2x1
jax: 0.10.0
libtpu: 0.0.40
codegen_flags: <defaults>
</compile_context>

<pallas_src>
import jax
import jax.numpy as jnp
from jax import lax
from jax.experimental import pallas as pl
from jax.experimental.pallas import tpu as pltpu

EPS = 1e-5


def prenorm_conv1x1_kernel(x_ref, w_ref, wb_ref, o_ref):
    # x_ref: (C, THW) tile -- channels on sublanes, spatial on lanes.
    x = x_ref[...].astype(jnp.float32)
    inv_c = 1.0 / x.shape[0]

    # LayerNorm statistics over channels (sublane reduction); torch.var(unbiased=False).
    sum_x = jnp.sum(x, axis=0, keepdims=True)        # (1, THW)
    sum_x2 = jnp.sum(x * x, axis=0, keepdims=True)   # (1, THW)
    mean = sum_x * inv_c
    var = sum_x2 * inv_c - mean * mean               # E[x^2] - mean^2, kept in f32
    inv_std = lax.rsqrt(var + EPS)
    normed = (x - mean) * inv_std                    # affine (g, b) folded into w/wb

    # fn = 1x1 conv over channels: (C, C) @ (C, THW) + (C, 1)
    y = jnp.dot(w_ref[...], normed, preferred_element_type=jnp.float32) + wb_ref[...]
    o_ref[...] = y.astype(o_ref.dtype)


def prenorm_pallas(x_nchw, g, b, w, wb, *, target_tile_bytes=2 * 1024 * 1024):
    """PreNorm forward: Conv2d(C, C, 1)(LayerNorm_channels(x)).

    x_nchw: (N, C, H, W); g, b: (C,) LayerNorm affine; w: (C_out, C_in) 1x1 conv weight;
    wb: (C_out,) conv bias.  Returns (N, C, H, W) in x's dtype.
    """
    N, C, H, W = x_nchw.shape
    HW = H * W

    # Free reshape (NCHW is contiguous): channels stay on the second axis, no transpose.
    x3 = x_nchw.reshape(N, C, HW)

    # Fold the LayerNorm affine into the pointwise conv:
    #   w @ (xhat * g + b) + wb == (w * g[None, :]) @ xhat + (w @ b + wb)
    g32 = g.reshape(-1).astype(jnp.float32)
    b32 = b.reshape(-1).astype(jnp.float32)
    w32 = w.astype(jnp.float32)
    w_fold = w32 * g32[None, :]                                   # (C, C)
    wb_fold = (w32 @ b32 + wb.astype(jnp.float32)).reshape(C, 1)  # (C, 1)

    # Spatial (lane) tile: multiple of 128, ~target_tile_bytes per x tile.
    bytes_per_col = max(C, 8) * x_nchw.dtype.itemsize   # sublane-padded column estimate
    lane_target = max(128, (target_tile_bytes // bytes_per_col) // 128 * 128)
    thw = min(lane_target, pl.cdiv(HW, 128) * 128)
    hw_padded = pl.cdiv(HW, thw) * thw
    if hw_padded != HW:
        # Zero padding is safe: var=0 -> rsqrt(eps) finite; padded columns sliced off below.
        x3 = jnp.pad(x3, ((0, 0), (0, 0), (0, hw_padded - HW)))

    grid = (N, hw_padded // thw)

    out3 = pl.pallas_call(
        prenorm_conv1x1_kernel,
        out_shape=jax.ShapeDtypeStruct((N, C, hw_padded), x_nchw.dtype),
        grid=grid,
        in_specs=[
            pl.BlockSpec((None, C, thw), lambda n, j: (n, 0, j)),   # x tile (batch squeezed)
            pl.BlockSpec((C, C), lambda n, j: (0, 0)),              # folded conv weight
            pl.BlockSpec((C, 1), lambda n, j: (0, 0)),              # folded conv bias
        ],
        out_specs=pl.BlockSpec((None, C, thw), lambda n, j: (n, 0, j)),
        compiler_params=pltpu.CompilerParams(
            dimension_semantics=("parallel", "parallel"),
            vmem_limit_bytes=48 * 1024 * 1024,   # leave headroom for v7x's 64 MiB VMEM
        ),
    )(x3, w_fold, wb_fold)

    if hw_padded != HW:
        out3 = out3[:, :, :HW]
    return out3.reshape(N, C, H, W)


def prenorm_reference(x_nchw, g, b, w, wb):
    """Pure-JAX reference matching the PyTorch module semantics (NCHW)."""
    mean = jnp.mean(x_nchw, axis=1, keepdims=True)
    var = jnp.mean((x_nchw - mean) ** 2, axis=1, keepdims=True)   # unbiased=False
    normed = (x_nchw - mean) / jnp.sqrt(var + EPS) * g.reshape(1, -1, 1, 1) + b.reshape(1, -1, 1, 1)
    # 1x1 conv: out[n, o, h, w] = sum_i w[o, i] * normed[n, i, h, w] + wb[o]
    y = jnp.einsum("oi,nihw->nohw", w, normed) + wb.reshape(1, -1, 1, 1)
    return y


if __name__ == "__main__":
    key = jax.random.PRNGKey(0)
    N, C, H, W = 2, 4, 16, 16   # small shapes consistent with the module

    kx, kg, kb, kw, kwb = jax.random.split(key, 5)
    x = jax.random.normal(kx, (N, C, H, W), dtype=jnp.float32)

    # LayerNorm params (module init is ones/zeros; perturb slightly to exercise the affine fold).
    g = 1.0 + 0.1 * jax.random.normal(kg, (C,), dtype=jnp.float32)
    b = 0.05 * jax.random.normal(kb, (C,), dtype=jnp.float32)

    # fn = Conv2d(dim, dim, 1): deterministic synthetic init.
    w = 0.1 * jax.random.normal(kw, (C, C), dtype=jnp.float32)    # (out_c, in_c)
    wb = 0.01 * jax.random.normal(kwb, (C,), dtype=jnp.float32)

    out = prenorm_pallas(x, g, b, w, wb)
    out = jax.block_until_ready(out)

    ref = prenorm_reference(x, g, b, w, wb)
    assert out.shape == ref.shape == (N, C, H, W)
    assert jnp.allclose(out, ref, atol=1e-4, rtol=1e-4), "mismatch vs reference"

    print("KERNEL_OK")
</pallas_src>

<mosaic_0001>
module attributes {stable_mosaic.version = 11 : i64} {
  func.func @prenorm_conv1x1_kernel(%arg0: i32, %arg1: i32, %arg2: memref<1x4x256xf32, #tpu.memory_space<vmem>>, %arg3: memref<4x4xf32, #tpu.memory_space<vmem>>, %arg4: memref<4x1xf32, #tpu.memory_space<vmem>>, %arg5: memref<1x4x256xf32, #tpu.memory_space<vmem>>) attributes {dimension_semantics = [#tpu.dimension_semantics<parallel>, #tpu.dimension_semantics<parallel>], iteration_bounds = array<i64: 2, 1>, scalar_prefetch = 0 : i64, scratch_operands = 0 : i64, tpu.core_type = #tpu.core_type<tc>, window_params = [{transform_indices = @transform_0, window_bounds = array<i64: 1, 4, 256>}, {pipeline_mode = #tpu.pipeline_mode<synchronous>, transform_indices = @transform_1, window_bounds = array<i64: 4, 4>}, {pipeline_mode = #tpu.pipeline_mode<synchronous>, transform_indices = @transform_2, window_bounds = array<i64: 4, 1>}, {transform_indices = @transform_3, window_bounds = array<i64: 1, 4, 256>}]} {
    %c0 = arith.constant 0 : index
    %c0_0 = arith.constant 0 : index
    %c0_1 = arith.constant 0 : index
    %0 = vector.load %arg2[%c0, %c0_0, %c0_1] : memref<1x4x256xf32, #tpu.memory_space<vmem>>, vector<1x4x256xf32>
    %1 = vector.shape_cast %0 : vector<1x4x256xf32> to vector<4x256xf32>
    %cst = arith.constant dense<0.000000e+00> : vector<256xf32>
    %2 = vector.multi_reduction <add>, %1, %cst [0] : vector<4x256xf32> to vector<256xf32>
    %3 = vector.shape_cast %2 : vector<256xf32> to vector<1x256xf32>
    %4 = arith.mulf %1, %1 : vector<4x256xf32>
    %cst_2 = arith.constant dense<0.000000e+00> : vector<256xf32>
    %5 = vector.multi_reduction <add>, %4, %cst_2 [0] : vector<4x256xf32> to vector<256xf32>
    %6 = vector.shape_cast %5 : vector<256xf32> to vector<1x256xf32>
    %cst_3 = arith.constant 2.500000e-01 : f32
    %7 = vector.broadcast %cst_3 : f32 to vector<1x256xf32>
    %8 = arith.mulf %3, %7 : vector<1x256xf32>
    %cst_4 = arith.constant 2.500000e-01 : f32
    %9 = vector.broadcast %cst_4 : f32 to vector<1x256xf32>
    %10 = arith.mulf %6, %9 : vector<1x256xf32>
    %11 = arith.mulf %8, %8 : vector<1x256xf32>
    %12 = arith.subf %10, %11 : vector<1x256xf32>
    %cst_5 = arith.constant 9.99999974E-6 : f32
    %13 = vector.broadcast %cst_5 : f32 to vector<1x256xf32>
    %14 = arith.addf %12, %13 : vector<1x256xf32>
    %15 = math.rsqrt %14 : vector<1x256xf32>
    %16 = vector.broadcast %8 : vector<1x256xf32> to vector<4x256xf32>
    %17 = arith.subf %1, %16 : vector<4x256xf32>
    %18 = vector.broadcast %15 : vector<1x256xf32> to vector<4x256xf32>
    %19 = arith.mulf %17, %18 : vector<4x256xf32>
    %c0_6 = arith.constant 0 : index
    %c0_7 = arith.constant 0 : index
    %20 = vector.load %arg3[%c0_6, %c0_7] : memref<4x4xf32, #tpu.memory_space<vmem>>, vector<4x4xf32>
    %cst_8 = arith.constant dense<0.000000e+00> : vector<4x256xf32>
    %21 = tpu.matmul %20, %19, %cst_8 {dimension_numbers = #tpu.dot_dimension_numbers<[1], [0], [0], [1], [0, 0, 1, 1], [], []>} : vector<4x4xf32>, vector<4x256xf32>, vector<4x256xf32> -> vector<4x256xf32>
    %c0_9 = arith.constant 0 : index
    %c0_10 = arith.constant 0 : index
    %22 = vector.load %arg4[%c0_9, %c0_10] : memref<4x1xf32, #tpu.memory_space<vmem>>, vector<4x1xf32>
    %23 = vector.broadcast %22 : vector<4x1xf32> to vector<4x256xf32>
    %24 = arith.addf %21, %23 : vector<4x256xf32>
    %c0_11 = arith.constant 0 : index
    %c0_12 = arith.constant 0 : index
    %c0_13 = arith.constant 0 : index
    %25 = vector.load %arg5[%c0_11, %c0_12, %c0_13] : memref<1x4x256xf32, #tpu.memory_space<vmem>>, vector<1x4x256xf32>
    %26 = vector.shape_cast %25 : vector<1x4x256xf32> to vector<4x256xf32>
    %27 = vector.shape_cast %24 : vector<4x256xf32> to vector<1x4x256xf32>
    tpu.vector_store %arg5[%c0_11, %c0_12, %c0_13], %27 {strides = array<i32>} : memref<1x4x256xf32, #tpu.memory_space<vmem>>, vector<1x4x256xf32>,
    return
  }
  func.func @transform_0(%arg0: i32, %arg1: i32) -> (i32, i32, i32) {
    %c0_i32 = arith.constant 0 : i32
    %c0_i32_0 = arith.constant 0 : i32
    return %arg0, %c0_i32, %arg1 : i32, i32, i32
  }
  func.func @transform_1(%arg0: i32, %arg1: i32) -> (i32, i32) {
    %c0_i32 = arith.constant 0 : i32
    %c0_i32_0 = arith.constant 0 : i32
    %c0_i32_1 = arith.constant 0 : i32
    return %c0_i32, %c0_i32_0 : i32, i32
  }
  func.func @transform_2(%arg0: i32, %arg1: i32) -> (i32, i32) {
    %c0_i32 = arith.constant 0 : i32
    %c0_i32_0 = arith.constant 0 : i32
    %c0_i32_1 = arith.constant 0 : i32
    return %c0_i32, %c0_i32_0 : i32, i32
  }
  func.func @transform_3(%arg0: i32, %arg1: i32) -> (i32, i32, i32) {
    %c0_i32 = arith.constant 0 : i32
    %c0_i32_0 = arith.constant 0 : i32
    return %arg0, %c0_i32, %arg1 : i32, i32, i32
  }
}

</mosaic_0001>

<llo_original>
// kernel: tpu_custom_call.1
$region0: #{tpu_custom_call.1}
  #allocation0 [shape = 'u32[]', space=smem, size = 0x4, offset = 0x4, fixed_abs, tag = 'smem constant byte address 0x4 - core index']
  #allocation1 [shape = 'u32[144,128]{1,0:T(1,128)}', space=vmem, size = 0x12000, scoped, tag = 'internal scratch']
  %s0 = inlined_call_operand.hbm [shape: f32[2,4,256], index: 0, kind: input, shape index: {}]
  %s1 = inlined_call_operand.vmem [shape: f32[4,4], index: 1, kind: input, shape index: {}]
  %s2 = inlined_call_operand.vmem [shape: f32[4,1], index: 2, kind: input, shape index: {}]
  %s3 = inlined_call_operand.hbm [shape: f32[2,4,256], index: 3, kind: output, shape index: {}]
  %s4 = sld [smem:[#allocation0]]
  $region49: #{tpu_custom_call.1} parent=0
    _
  %s6 = ssub.s32 1, %s4
  %s7 = scalar_select 0, %s6, %s4
  $region1: #{tpu_custom_call.1} parent=0
    #allocation2 [shape = 'u8[8192]{0}', space=vmem, size = 0x2000, scoped, tag = 'input window, operand 0']
    #allocation3 [shape = 's32[2]{0}', space=sflag, size = 0x8, scoped, tag = 'scoped memory for tpu_custom_call.1']
    #allocation4 [shape = 's32[2]{0}', space=sflag, size = 0x8, scoped, tag = 'scoped memory for tpu_custom_call.1']
    #allocation5 [shape = 'u8[8192]{0}', space=vmem, size = 0x2000, scoped, tag = 'output window, operand 0']
    %8 = vsyncpa [#allocation3], 0
    %s9 = scalar_lea.sflag [#allocation3], 1
    %10 = vsyncpa %s9, 0
    %11 = vsyncpa [#allocation4], 0
    %s12 = scalar_lea.sflag [#allocation4], 1
    %13 = vsyncpa %s12, 0
    loop: start=0, step=1, limit=4
    $region2: #{tpu_custom_call.1} parent=1 // loop_pre_header
      _
    $region3: #{tpu_custom_call.1} parent=1 // loop_header
      %s15 = sphi 0, %s19
      %p16 = scmp.ge.s32.totalorder %s15, 4
      %s22 = sphi 0, %s34
      %s23 = sphi 0, %s30
      %s24 = sphi 0, %s22
      %s25 = sphi 0, %s23
      %s26 = sphi 0, %s24
      %s27 = sphi 0, %s25
      %s39 = sphi 0, %s41
      %s42 = sphi 0, %s39
      %s43 = sphi 0, %s42
      %s59 = sphi 0, %s43
      %s63 = sphi 0, %s63
      %s65 = sphi 0, %s63
      %s66 = sphi 0, %s65
      %s80 = sphi 0, %s66
      %s84 = sphi 0, %s84
      %s86 = sphi 0, %s84
      %s87 = sphi 0, %s86
      %s101 = sphi 0, %s87
      %s109 = sphi 0, %s111
      %s112 = sphi 0, %s109
      %s113 = sphi 0, %s112
      %s129 = sphi 0, %s113
    $region4: #{tpu_custom_call.1} parent=1 // loop_header_branch
      %18 = sbr.rel (%p16) target = $region8
    $region5: #{tpu_custom_call.1} parent=1 // loop_body
      %s20 = ssub.s32 %s15, 1
      %s21 = ssub.s32 %s15, 2
      %s28 = sadd.s32 1, %s23
      %p29 = scmp.ge.s32.totalorder %s28, 1
      %s30 = scalar_select %p29, 0, %s28
      %s31 = sadd.s32 1, %s22
      %s32 = scalar_select %p29, %s31, %s22
      %p33 = scmp.ge.s32.totalorder %s32, 2
      %s34 = scalar_select %p33, 0, %s32
      %s35 = ssub.s32 %s22, %s34
      %s36 = ssub.s32 %s23, %s30
      %s37 = sor.u32 %s35, %s36
      %p38 = scmp.eq.s32.totalorder %s37, 0
      %s40 = sadd.s32 %s39, 1
      %s41 = scalar_select %p38, %s39, %s40
      %p44 = pneg %p38
      %p45 = scmp.eq.s32.totalorder %s15, 1
      %p46 = por %p44, %p45
      %p47 = scmp.ne.s32.totalorder %s39, %s42
      %p48 = scmp.eq.s32.totalorder %s15, 0
      %p49 = por %p47, %p48
      %p50 = scmp.ne.s32.totalorder %s39, %s42
      %p51 = scmp.eq.s32.totalorder %s20, 1
      %p52 = por %p50, %p51
      %p53 = scmp.ne.s32.totalorder %s42, %s43
      %p54 = scmp.eq.s32.totalorder %s20, 0
      %p55 = por %p53, %p54
      %p56 = scmp.ne.s32.totalorder %s42, %s43
      %p57 = scmp.eq.s32.totalorder %s21, 1
      %p58 = por %p56, %p57
      %p60 = scmp.ne.s32.totalorder %s43, %s59
      %p61 = scmp.eq.s32.totalorder %s21, 0
      %p62 = por %p60, %p61
      %s64 = sadd.s32 %s63, 1
      %p67 = scmp.eq.s32.totalorder %s15, 1
      %p68 = scmp.ne.s32.totalorder %s63, %s65
      %p69 = scmp.eq.s32.totalorder %s15, 0
      %p70 = por %p68, %p69
      %p71 = scmp.ne.s32.totalorder %s63, %s65
      %p72 = scmp.eq.s32.totalorder %s20, 1
      %p73 = por %p71, %p72
      %p74 = scmp.ne.s32.totalorder %s65, %s66
      %p75 = scmp.eq.s32.totalorder %s20, 0
      %p76 = por %p74, %p75
      %p77 = scmp.ne.s32.totalorder %s65, %s66
      %p78 = scmp.eq.s32.totalorder %s21, 1
      %p79 = por %p77, %p78
      %p81 = scmp.ne.s32.totalorder %s66, %s80
      %p82 = scmp.eq.s32.totalorder %s21, 0
      %p83 = por %p81, %p82
      %s85 = sadd.s32 %s84, 1
      %p88 = scmp.eq.s32.totalorder %s15, 1
      %p89 = scmp.ne.s32.totalorder %s84, %s86
      %p90 = scmp.eq.s32.totalorder %s15, 0
      %p91 = por %p89, %p90
      %p92 = scmp.ne.s32.totalorder %s84, %s86
      %p93 = scmp.eq.s32.totalorder %s20, 1
      %p94 = por %p92, %p93
      %p95 = scmp.ne.s32.totalorder %s86, %s87
      %p96 = scmp.eq.s32.totalorder %s20, 0
      %p97 = por %p95, %p96
      %p98 = scmp.ne.s32.totalorder %s86, %s87
      %p99 = scmp.eq.s32.totalorder %s21, 1
      %p100 = por %p98, %p99
      %p102 = scmp.ne.s32.totalorder %s87, %s101
      %p103 = scmp.eq.s32.totalorder %s21, 0
      %p104 = por %p102, %p103
      %s105 = ssub.s32 %s22, %s34
      %s106 = ssub.s32 %s23, %s30
      %s107 = sor.u32 %s105, %s106
      %p108 = scmp.eq.s32.totalorder %s107, 0
      %s110 = sadd.s32 %s109, 1
      %s111 = scalar_select %p108, %s109, %s110
      %p114 = pneg %p108
      %p115 = scmp.eq.s32.totalorder %s15, 1
      %p116 = por %p114, %p115
      %p117 = scmp.ne.s32.totalorder %s109, %s112
      %p118 = scmp.eq.s32.totalorder %s15, 0
      %p119 = por %p117, %p118
      %p120 = scmp.ne.s32.totalorder %s109, %s112
      %p121 = scmp.eq.s32.totalorder %s20, 1
      %p122 = por %p120, %p121
      %p123 = scmp.ne.s32.totalorder %s112, %s113
      %p124 = scmp.eq.s32.totalorder %s20, 0
      %p125 = por %p123, %p124
      %p126 = scmp.ne.s32.totalorder %s112, %s113
      %p127 = scmp.eq.s32.totalorder %s21, 1
      %p128 = por %p126, %p127
      %p130 = scmp.ne.s32.totalorder %s113, %s129
      %p131 = scmp.eq.s32.totalorder %s21, 0
      %p132 = por %p130, %p131
      %p133 = scmp.le.s32.totalorder 1, %s15
      %p134 = scmp.lt.s32.totalorder %s15, 3
      %p135 = pnand %p133, %p134
      %p136 = pneg %p135
      // Predicated region
      $region9: #{tpu_custom_call.1} parent=5 // pred_check
        _
      $region10: #{tpu_custom_call.1} parent=5 // pred_check_branch
        %138 = sbr.rel (%p135) target = $region12
      $region11: #{tpu_custom_call.1} parent=5 // pred_region
        %s139 = ssub.s32 %s15, 1
        // Predicated region
        $region13: #{tpu_custom_call.1} parent=11 // pred_check
          %p140 = pneg %p76
        $region14: #{tpu_custom_call.1} parent=11 // pred_check_branch
          %142 = sbr.rel (%p140) target = $region16
        $region15: #{tpu_custom_call.1} parent=11 // pred_region
          _
        $region16: #{tpu_custom_call.1} parent=11 // pred_fallthru
          _
        // Predicated region
        $region17: #{tpu_custom_call.1} parent=11 // pred_check
          %p143 = pneg %p97
        $region18: #{tpu_custom_call.1} parent=11 // pred_check_branch
          %145 = sbr.rel (%p143) target = $region20
        $region19: #{tpu_custom_call.1} parent=11 // pred_region
          _
        $region20: #{tpu_custom_call.1} parent=11 // pred_fallthru
          _
      $region12: #{tpu_custom_call.1} parent=5 // pred_fallthru
        _
      %p146 = scmp.lt.s32.totalorder %s15, 2
      // Predicated region
      $region21: #{tpu_custom_call.1} parent=5 // pred_check
        %p147 = pneg %p146
      $region22: #{tpu_custom_call.1} parent=5 // pred_check_branch
        %149 = sbr.rel (%p147) target = $region24
      $region23: #{tpu_custom_call.1} parent=5 // pred_region
        // Predicated region
        $region25: #{tpu_custom_call.1} parent=23 // pred_check
          %p150 = pneg %p49
        $region26: #{tpu_custom_call.1} parent=23 // pred_check_branch
          %152 = sbr.rel (%p150) target = $region28
        $region27: #{tpu_custom_call.1} parent=23 // pred_region
          %s153 = sand.u32 %s39, 1
          %s154 = scalar_lea.sflag [#allocation3], %s153
          %s155 = sand.u32 %s39, 1
          %s156 = smul.addr %s155, 8
          %s157 = scalar_lea.vmem [#allocation2], %s156
          %s158 = smul.u32 2, %s23
          %s160 = ssub.s32 128, 128
          %161 = vsyncadd %s154, %s160
          %s162 = smul.addr %s22, 2
          %s163 = sadd.s32 %s158, %s162
          %s164 = smul.addr %s163, 64
          %s165 = scalar_lea.hbm %s0, %s164
          %s167 = sshll.u32 %s157, 4
          %s168 = int_to_ptr.vmem [resolvable:$true] %s167
          %170 = dma.hbm_to_vmem [thread:$0]  %s165, 128, %s168, %s154
        $region28: #{tpu_custom_call.1} parent=23 // pred_fallthru
          _
      $region24: #{tpu_custom_call.1} parent=5 // pred_fallthru
        _
      %p171 = scmp.le.s32.totalorder 1, %s15
      %p172 = scmp.lt.s32.totalorder %s15, 3
      %p173 = pnand %p171, %p172
      %p174 = pneg %p173
      // Predicated region
      $region29: #{tpu_custom_call.1} parent=5 // pred_check
        _
      $region30: #{tpu_custom_call.1} parent=5 // pred_check_branch
        %176 = sbr.rel (%p173) target = $region32
      $region31: #{tpu_custom_call.1} parent=5 // pred_region
        %s177 = ssub.s32 %s15, 1
        %s178 = sand.u32 %s42, 1
        %s179 = scalar_lea.sflag [#allocation3], %s178
        %s180 = sand.u32 %s42, 1
        %s181 = smul.addr %s180, 8
        %s182 = scalar_lea.vmem [#allocation2], %s181
        // Predicated region
        $region33: #{tpu_custom_call.1} parent=31 // pred_check
          %p183 = pneg %p55
        $region34: #{tpu_custom_call.1} parent=31 // pred_check_branch
          %185 = sbr.rel (%p183) target = $region36
        $region35: #{tpu_custom_call.1} parent=31 // pred_region
          %186 = dma.done %s179, 128
        $region36: #{tpu_custom_call.1} parent=31 // pred_fallthru
          _
        %s187 = sand.u32 %s42, 1
        %s188 = scalar_lea.sflag [#allocation3], %s187
        %s189 = sand.u32 %s42, 1
        %s190 = smul.addr %s189, 8
        %s191 = scalar_lea.vmem [#allocation2], %s190
        %p192 = pneg %p55
        %p193 = pneg %p52
        %p194 = pneg %p76
        %p195 = pneg %p73
        %p196 = pneg %p97
        %p197 = pneg %p94
        %p198 = pneg %p125
        %p199 = pneg %p122
        %s200 = sand.u32 %s112, 1
        %s201 = scalar_lea.sflag [#allocation4], %s200
        %s202 = sand.u32 %s112, 1
        %s203 = smul.addr %s202, 8
        %s204 = scalar_lea.vmem [#allocation5], %s203
        %s205 = smul.u32 2, %s25
        %s206 = smul.u32 2, %s25
        %v207 = vld [vmem:[%s182] sm:$0xff]
        %v209 = vcombine.high %v207, %v207
        %vm211 = vcmask 1043456
        %v212 = vsel %vm211, %v207, 0.0
        %v213 = vrot.slane %v212, 4
        %v214 = vadd.f32 %v212, %v213
        %v215 = vrot.slane %v214, 2
        %v216 = vadd.f32 %v214, %v215
        %v217 = vrot.slane %v216, 1
        %v218 = vadd.f32 %v216, %v217
        %v219 = vsel %vm211, %v209, 0.0
        %v220 = vrot.slane %v219, 4
        %v221 = vadd.f32 %v219, %v220
        %v222 = vrot.slane %v221, 2
        %v223 = vadd.f32 %v221, %v222
        %v224 = vrot.slane %v223, 1
        %v225 = vadd.f32 %v223, %v224
        %v226 = vmul.f32 %v207, %v207
        %v228 = vcombine.high %v226, %v226
        %v230 = vsel %vm211, %v226, 0.0
        %v231 = vrot.slane %v230, 4
        %v232 = vadd.f32 %v230, %v231
        %v233 = vrot.slane %v232, 2
        %v234 = vadd.f32 %v232, %v233
        %v235 = vrot.slane %v234, 1
        %v236 = vadd.f32 %v234, %v235
        %v237 = vsel %vm211, %v228, 0.0
        %v238 = vrot.slane %v237, 4
        %v239 = vadd.f32 %v237, %v238
        %v240 = vrot.slane %v239, 2
        %v241 = vadd.f32 %v239, %v240
        %v242 = vrot.slane %v241, 1
        %v243 = vadd.f32 %v241, %v242
        %v244 = vmul.f32 %v218, 0.25
        %v245 = vmul.f32 %v225, 0.25
        %v246 = vmul.f32 %v236, 0.25
        %v247 = vmul.f32 %v243, 0.25
        %v248 = vmul.f32 %v244, %v244
        %v249 = vmul.f32 %v245, %v245
        %v250 = vsub.f32 %v246, %v248
        %v251 = vsub.f32 %v247, %v249
        %v252 = vadd.f32 %v250, 1e-05
        %v253 = vadd.f32 %v251, 1e-05
        %v254 = vrsqrt.pop %v252
        %v255 = vrsqrt.pop %v253
        %v258 = vcombine.low %v244, %v245
        %v260 = vsub.f32 %v207, %v258
        %v263 = vcombine.low %v254, %v255
        %v265 = vmul.f32 %v260, %v263
        %v266 = vld [vmem:[%s1] sm:$0xf]
        %v267 = vld [vmem:[%s2] sm:$0xf]
        %269 = vset.pattern.permute.xlu0 0
        %270 = vperm.xlu0 %269, %v267
        %v271 = vpop.permute.xlu0 %270
        %v274 = vcombine.high %v265, %v265
        %vm275 = vcmask 31744
        %v277 = vsel %vm275, %v266, 0
        %v279 = vsel %vm211, %v265, 0
        %v281 = vsel %vm211, %v274, 0
        %283 = vmatprep.subr.mxu0 %v281
        %284 = vmatpush1.msra.mxu0 %v279
        %285 = vmatprep.subr.mxu0 0.0
        %286 = vmatpush1.msra.mxu0 0.0
        %287 = vmatprep.subr.mxu0 0.0
        %288 = vmatpush1.msra.mxu0 0.0
        %289 = vmatprep.subr.mxu0 0.0
        %290 = vmatpush1.msra.mxu0 0.0
        %291 = vmatprep.subr.mxu0 0.0
        %292 = vmatpush1.msra.mxu0 0.0
        %293 = vmatprep.subr.mxu0 0.0
        %294 = vmatpush1.msra.mxu0 0.0
        %295 = vmatprep.subr.mxu0 0.0
        %296 = vmatpush1.msra.mxu0 0.0
        %297 = vmatprep.subr.mxu0 0.0
        %298 = vmatpush1.msra.mxu0 0.0
        %299 = vmatprep.subr.mxu0 0.0
        %300 = vmatpush1.msra.mxu0 0.0
        %301 = vmatprep.subr.mxu0 0.0
        %302 = vmatpush1.msra.mxu0 0.0
        %303 = vmatprep.subr.mxu0 0.0
        %304 = vmatpush1.msra.mxu0 0.0
        %305 = vmatprep.subr.mxu0 0.0
        %306 = vmatpush1.msra.mxu0 0.0
        %307 = vmatprep.subr.mxu0 0.0
        %308 = vmatpush1.msra.mxu0 0.0
        %309 = vmatprep.subr.mxu0 0.0
        %310 = vmatpush1.msra.mxu0 0.0
        %311 = vmatprep.subr.mxu0 0.0
        %312 = vmatpush1.msra.mxu0 0.0
        %313 = vmatprep.subr.mxu0 0.0
        %314 = vmatpush1.msra.mxu0 0.0
        %315 = vmatprep.subr.mxu0 0.0
        %316 = vmatpush1.msra.mxu0 0.0
        %317 = vmatprep.subr.mxu0 0.0
        %318 = vmatpush1.msra.mxu0 0.0
        %319 = vmatprep.subr.mxu0 0.0
        %320 = vmatpush1.msra.mxu0 0.0
        %321 = vmatprep.subr.mxu0 0.0
        %322 = vmatpush1.msra.mxu0 0.0
        %323 = vmatprep.subr.mxu0 0.0
        %324 = vmatpush1.msra.mxu0 0.0
        %325 = vmatprep.subr.mxu0 0.0
        %326 = vmatpush1.msra.mxu0 0.0
        %327 = vmatprep.subr.mxu0 0.0
        %328 = vmatpush1.msra.mxu0 0.0
        %329 = vmatprep.subr.mxu0 0.0
        %330 = vmatpush1.msra.mxu0 0.0
        %331 = vmatprep.subr.mxu0 0.0
        %332 = vmatpush1.msra.mxu0 0.0
        %333 = vmatprep.subr.mxu0 0.0
        %334 = vmatpush1.msra.mxu0 0.0
        %335 = vmatprep.subr.mxu0 0.0
        %336 = vmatpush1.msra.mxu0 0.0
        %337 = vmatprep.subr.mxu0 0.0
        %338 = vmatpush1.msra.mxu0 0.0
        %339 = vmatprep.subr.mxu0 0.0
        %340 = vmatpush1.msra.mxu0 0.0
        %341 = vmatprep.subr.mxu0 0.0
        %342 = vmatpush1.msra.mxu0 0.0
        %343 = vmatprep.subr.mxu0 0.0
        %344 = vmatpush1.msra.mxu0 0.0
        %345 = vmatprep.subr.mxu0 0.0
        %346 = vmatpush1.msra.mxu0 0.0
        %347 = vmatprep.mubr.f32.mxu0 0.0
        %348 = vmatmul.mubr.f32.gmra.mrb[0].mxu0 %v277
        %v349 = vpop.f32.mrb[0].mxu0
        %v350 = vadd.f32 %v271, %v349
        %v351 = vpop.f32.mrb[0].mxu0
        %v352 = vadd.f32 %v271, %v351
        %353 = vdwg.mxu0
        %v356 = vcombine.low %v350, %v352
        %358 = vst [vmem:[%s204] sm:$0xff] %v356
        %s359 = sand.u32 %s112, 1
        %s360 = scalar_lea.sflag [#allocation4], %s359
        %s361 = sand.u32 %s112, 1
        %s362 = smul.addr %s361, 8
        %s363 = scalar_lea.vmem [#allocation5], %s362
        // Predicated region
        $region37: #{tpu_custom_call.1} parent=31 // pred_check
          %p364 = pneg %p122
        $region38: #{tpu_custom_call.1} parent=31 // pred_check_branch
          %366 = sbr.rel (%p364) target = $region40
        $region39: #{tpu_custom_call.1} parent=31 // pred_region
          %s367 = smul.u32 2, %s25
          %s369 = ssub.s32 128, 128
          %370 = vsyncadd %s360, %s369
          %s371 = smul.addr %s24, 2
          %s372 = sadd.s32 %s367, %s371
          %s373 = smul.addr %s372, 64
          %s374 = scalar_lea.hbm %s3, %s373
          %s376 = sshll.u32 %s363, 4
          %s377 = int_to_ptr.vmem [resolvable:$true] %s376
          %379 = dma.vmem_to_hbm [thread:$0]  %s377, 128, %s374, %s360
        $region40: #{tpu_custom_call.1} parent=31 // pred_fallthru
          _
      $region32: #{tpu_custom_call.1} parent=5 // pred_fallthru
        _
      %p380 = scmp.le.s32.totalorder 2, %s15
      // Predicated region
      $region41: #{tpu_custom_call.1} parent=5 // pred_check
        %p381 = pneg %p380
      $region42: #{tpu_custom_call.1} parent=5 // pred_check_branch
        %383 = sbr.rel (%p381) target = $region44
      $region43: #{tpu_custom_call.1} parent=5 // pred_region
        %s384 = ssub.s32 %s15, 2
        // Predicated region
        $region45: #{tpu_custom_call.1} parent=43 // pred_check
          %p385 = pneg %p128
        $region46: #{tpu_custom_call.1} parent=43 // pred_check_branch
          %387 = sbr.rel (%p385) target = $region48
        $region47: #{tpu_custom_call.1} parent=43 // pred_region
          %s388 = sand.u32 %s113, 1
          %s389 = scalar_lea.sflag [#allocation4], %s388
          %s390 = sand.u32 %s113, 1
          %s391 = smul.addr %s390, 8
          %s392 = scalar_lea.vmem [#allocation5], %s391
          %393 = dma.done %s389, 128
        $region48: #{tpu_custom_call.1} parent=43 // pred_fallthru
          _
      $region44: #{tpu_custom_call.1} parent=5 // pred_fallthru
        _
    $region6: #{tpu_custom_call.1} parent=1 // loop_footer
      %s19 = sadd.s32 1, %s15
    $region7: #{tpu_custom_call.1} parent=1 // loop_footer_branch
      %14 = sbr.rel target = $region3
    $region8: #{tpu_custom_call.1} parent=1 // loop_exit
      _
    %394 = vsyncpa [#allocation3], 1
    %s395 = scalar_lea.sflag [#allocation3], 1
    %396 = vsyncpa %s395, 1
    %397 = vsyncpa [#allocation4], 1
    %s398 = scalar_lea.sflag [#allocation4], 1
    %399 = vsyncpa %s398, 1

</llo_original>
